<compile_context>
chip_gen: v6e
topology: v6e:2x2x1
jax: 0.10.0
libtpu: 0.0.40
codegen_flags: <defaults>
</compile_context>

<pallas_src>
import jax
import jax.numpy as jnp
from jax import lax
from jax.experimental import pallas as pl
from jax.experimental.pallas import tpu as pltpu


def _basic_norm_kernel(eps_ref, x_ref, o_ref):
    # eps_ref: SMEM scalar holding exp(log_eps) (precomputed in the wrapper).
    # x_ref / o_ref: (tm, D) VMEM tiles.
    x = x_ref[...].astype(jnp.float32)
    mean_sq = jnp.mean(x * x, axis=-1, keepdims=True)    # f32 accumulate over D
    scales = lax.rsqrt(mean_sq + eps_ref[0])             # (mean + eps)^-0.5 (EUP)
    o_ref[...] = (x * scales).astype(o_ref.dtype)


def _choose_tile_rows(rows, d, dtype, tile_rows, target_tile_bytes,
                      vmem_budget_bytes):
    """Pick a row-tile size: big enough to amortize per-grid-step overhead
    (~0.35 us/step), aligned to the dtype's sublane packing, and small enough
    that double-buffered in/out tiles + f32 compute intermediates fit VMEM."""
    itemsize = jnp.dtype(dtype).itemsize
    packing = 8 * max(1, 4 // itemsize)        # 8 (f32), 16 (bf16), 32 (int8/fp8)
    row_bytes = d * itemsize

    # Per resident row: (in + out) x 2 pipeline buffers in the native dtype,
    # plus ~3 f32-width live intermediates (x_f32, x*x, scaled result).
    per_row_resident = 4 * row_bytes + 3 * d * 4
    max_tm_vmem = max(packing, vmem_budget_bytes // per_row_resident)

    if tile_rows is None:
        tile_rows = max(packing, target_tile_bytes // row_bytes)

    tm = min(tile_rows, max_tm_vmem)
    tm = max(packing, (tm // packing) * packing)
    if rows <= tm:
        return rows    # single block == full array dim; always legal
    return tm


def basic_norm(x, log_eps, *, tile_rows=None,
               target_tile_bytes: int = 4 * 1024 * 1024,
               vmem_budget_bytes: int = 24 * 1024 * 1024):
    """BasicNorm forward. x: (B, T, D). log_eps: scalar learnable parameter."""
    B, T, D = x.shape
    rows = B * T
    x2d = x.reshape(rows, D)                   # free: collapses leading dims

    tm = _choose_tile_rows(rows, D, x.dtype, tile_rows, target_tile_bytes,
                           vmem_budget_bytes)
    grid = (pl.cdiv(rows, tm),)                # ragged last block is masked

    # Hoist the transcendental out of the kernel: pass eps = exp(log_eps).
    eps_arr = jnp.exp(jnp.asarray(log_eps, jnp.float32)).reshape(1)

    out2d = pl.pallas_call(
        _basic_norm_kernel,
        out_shape=jax.ShapeDtypeStruct((rows, D), x.dtype),
        grid=grid,
        in_specs=[
            pl.BlockSpec(memory_space=pltpu.SMEM),        # eps scalar
            pl.BlockSpec((tm, D), lambda i: (i, 0)),      # x tile
        ],
        out_specs=pl.BlockSpec((tm, D), lambda i: (i, 0)),
        compiler_params=pltpu.CompilerParams(
            dimension_semantics=("parallel",),            # v7x: rows over 2 TCs
        ),
    )(eps_arr, x2d)

    return out2d.reshape(B, T, D)


def basic_norm_ref(x, log_eps):
    x32 = x.astype(jnp.float32)
    scales = (jnp.mean(x32 ** 2, axis=-1, keepdims=True)
              + jnp.exp(log_eps)) ** (-0.5)
    return (x32 * scales).astype(x.dtype)


if __name__ == "__main__":
    # Parameter init matches the module's __init__: eps parameter = log(0.25).
    log_eps = jnp.log(jnp.asarray(0.25, jnp.float32))

    key = jax.random.PRNGKey(0)
    k0, k1, k2 = jax.random.split(key, 3)

    # Small shape consistent with the module's (B, T, D_hidden) layout.
    B, T, D = 2, 8, 32
    x = jax.random.normal(k0, (B, T, D), dtype=jnp.float32)
    out = jax.block_until_ready(basic_norm(x, log_eps))
    ref = basic_norm_ref(x, log_eps)
    assert out.shape == (B, T, D)
    assert jnp.allclose(out, ref, atol=1e-5, rtol=1e-5), "mismatch vs reference"

    # Exercise the pad-free ragged-last-block path (rows % tm != 0).
    B2, T2, D2 = 2, 13, 128
    x2 = jax.random.normal(k1, (B2, T2, D2), dtype=jnp.float32)
    out2 = jax.block_until_ready(basic_norm(x2, log_eps, tile_rows=8))
    ref2 = basic_norm_ref(x2, log_eps)
    assert jnp.allclose(out2, ref2, atol=1e-5, rtol=1e-5), "ragged-block mismatch"

    # Exercise the low-precision path (f32 accumulation inside the kernel).
    B3, T3, D3 = 2, 8, 256
    x3 = jax.random.normal(k2, (B3, T3, D3), dtype=jnp.bfloat16)
    out3 = jax.block_until_ready(basic_norm(x3, log_eps))
    ref3 = basic_norm_ref(x3, log_eps)
    assert jnp.allclose(out3.astype(jnp.float32), ref3.astype(jnp.float32),
                        atol=2e-2, rtol=2e-2), "bf16 mismatch"

    print("KERNEL_OK")
</pallas_src>

<mosaic_0001>
module attributes {stable_mosaic.version = 11 : i64} {
  func.func @_basic_norm_kernel(%arg0: i32, %arg1: memref<1xf32, #tpu.memory_space<smem>>, %arg2: memref<16x32xf32, #tpu.memory_space<vmem>>, %arg3: memref<16x32xf32, #tpu.memory_space<vmem>>) attributes {dimension_semantics = [#tpu.dimension_semantics<parallel>], iteration_bounds = array<i64: 1>, scalar_prefetch = 0 : i64, scratch_operands = 0 : i64, tpu.core_type = #tpu.core_type<tc>, window_params = [{transform_indices = @transform_0, window_bounds = array<i64: 1>}, {transform_indices = @transform_1, window_bounds = array<i64: 16, 32>}, {transform_indices = @transform_2, window_bounds = array<i64: 16, 32>}]} {
    %c0 = arith.constant 0 : index
    %c0_0 = arith.constant 0 : index
    %0 = vector.load %arg2[%c0, %c0_0] : memref<16x32xf32, #tpu.memory_space<vmem>>, vector<16x32xf32>
    %1 = arith.mulf %0, %0 : vector<16x32xf32>
    %cst = arith.constant dense<0.000000e+00> : vector<16xf32>
    %2 = vector.multi_reduction <add>, %1, %cst [1] : vector<16x32xf32> to vector<16xf32>
    %3 = vector.shape_cast %2 : vector<16xf32> to vector<16x1xf32>
    %cst_1 = arith.constant 3.200000e+01 : f32
    %4 = vector.broadcast %cst_1 : f32 to vector<16x1xf32>
    %5 = arith.divf %3, %4 : vector<16x1xf32>
    %c0_2 = arith.constant 0 : index
    %6 = memref.load %arg1[%c0_2] : memref<1xf32, #tpu.memory_space<smem>>
    %7 = vector.broadcast %6 : f32 to vector<16x1xf32>
    %8 = arith.addf %5, %7 : vector<16x1xf32>
    %9 = math.rsqrt %8 : vector<16x1xf32>
    %10 = vector.broadcast %9 : vector<16x1xf32> to vector<16x32xf32>
    %11 = arith.mulf %0, %10 : vector<16x32xf32>
    %c0_3 = arith.constant 0 : index
    %c0_4 = arith.constant 0 : index
    %12 = vector.load %arg3[%c0_3, %c0_4] : memref<16x32xf32, #tpu.memory_space<vmem>>, vector<16x32xf32>
    tpu.vector_store %arg3[%c0_3, %c0_4], %11 {strides = array<i32>} : memref<16x32xf32, #tpu.memory_space<vmem>>, vector<16x32xf32>,
    return
  }
  func.func @transform_0(%arg0: i32) -> i32 {
    %c0_i32 = arith.constant 0 : i32
    %c0_i32_0 = arith.constant 0 : i32
    return %c0_i32 : i32
  }
  func.func @transform_1(%arg0: i32) -> (i32, i32) {
    %c0_i32 = arith.constant 0 : i32
    %c0_i32_0 = arith.constant 0 : i32
    return %arg0, %c0_i32 : i32, i32
  }
  func.func @transform_2(%arg0: i32) -> (i32, i32) {
    %c0_i32 = arith.constant 0 : i32
    %c0_i32_0 = arith.constant 0 : i32
    return %arg0, %c0_i32 : i32, i32
  }
}

</mosaic_0001>

<llo_original>
// kernel: tpu_custom_call.1
$region0: #{tpu_custom_call.1}
  #allocation0 [shape = 'u32[]', space=smem, size = 0x4, offset = 0x4, fixed_abs, tag = 'smem constant byte address 0x4 - core index']
  #allocation1 [shape = 'u32[144,128]{1,0:T(1,128)}', space=vmem, size = 0x12000, scoped, tag = 'internal scratch']
  #allocation2 [shape = 'f32[1]{0:T(128)S(6)}', space=smem, size = 0x200, scoped, tag = 'scoped memory for tpu_custom_call.1']
  %s0 = inlined_call_operand.<no memory space> [shape: f32[1], index: 0, kind: input, shape index: {}]
  %s1 = inlined_call_operand.hbm [shape: f32[16,32], index: 1, kind: input, shape index: {}]
  %s2 = inlined_call_operand.hbm [shape: f32[16,32], index: 2, kind: output, shape index: {}]
  %s3 = sld [smem:[#allocation0]]
  $region22: #{tpu_custom_call.1} parent=0
    _
  %s5 = ssub.s32 1, %s3
  %s6 = scalar_select 0, %s5, %s3
  %7 = sst [smem:[#allocation2]] %s0
  $region1: #{tpu_custom_call.1} parent=0
    #allocation3 [shape = 'u8[8192]{0}', space=vmem, size = 0x2000, scoped, tag = 'input window, operand 1, single buffered']
    #allocation4 [shape = 's32[1]{0}', space=sflag, size = 0x4, scoped, tag = 'scoped memory for tpu_custom_call.1']
    #allocation5 [shape = 's32[1]{0}', space=sflag, size = 0x4, scoped, tag = 'scoped memory for tpu_custom_call.1']
    #allocation6 [shape = 'u8[8192]{0}', space=vmem, size = 0x2000, scoped, tag = 'output window, operand 0, single buffered']
    %8 = vsyncpa [#allocation4], 0
    %9 = vsyncpa [#allocation5], 0
    // Predicated region
    $region2: #{tpu_custom_call.1} parent=1 // pred_check
      _
    $region3: #{tpu_custom_call.1} parent=1 // pred_check_branch
      %11 = sbr.rel (0) target = $region5
    $region4: #{tpu_custom_call.1} parent=1 // pred_region
      _
    $region5: #{tpu_custom_call.1} parent=1 // pred_fallthru
      _
    // Predicated region
    $region6: #{tpu_custom_call.1} parent=1 // pred_check
      _
    $region7: #{tpu_custom_call.1} parent=1 // pred_check_branch
      %13 = sbr.rel (0) target = $region9
    $region8: #{tpu_custom_call.1} parent=1 // pred_region
      %s15 = ssub.s32 256, 256
      %16 = vsyncadd [#allocation4], %s15
      %s17 = sshll.u32 [#allocation3], 4
      %s18 = int_to_ptr.vmem [resolvable:$true] %s17
      %23 = dma.hbm_to_vmem [thread:$0]  %s1, 256, %s18, [#allocation4], 128, 128, 8
    $region9: #{tpu_custom_call.1} parent=1 // pred_fallthru
      _
    // Predicated region
    $region10: #{tpu_custom_call.1} parent=1 // pred_check
      _
    $region11: #{tpu_custom_call.1} parent=1 // pred_check_branch
      %25 = sbr.rel (0) target = $region13
    $region12: #{tpu_custom_call.1} parent=1 // pred_region
      %26 = dma.done [#allocation4], 256
    $region13: #{tpu_custom_call.1} parent=1 // pred_fallthru
      _
    %v27 = vld [vmem:[#allocation3] sm:$0xff]
    %v28 = vld [vmem:[#allocation3 + $0x8] sm:$0xff]
    %v29 = vmul.f32 %v27, %v27
    %v30 = vmul.f32 %v28, %v28
    %vm31 = vcmask 261120
    %v32 = vsel %vm31, %v29, 0.0
    %33 = vadd.xlane.f32.xlu0 %v32
    %v34 = vpop.xlane.xlu0 %33
    %v35 = vsel %vm31, %v30, 0.0
    %36 = vadd.xlane.f32.xlu0 %v35
    %v37 = vpop.xlane.xlu0 %36
    %v38 = vrcp.pop 32.0
    %v39 = vmul.f32 %v34, %v38
    %v40 = vmul.f32 %v37, %v38
    %s41 = sld [smem:[#allocation2]]
    %v42 = vstv %s41
    %v43 = vadd.f32 %v39, %v42
    %v44 = vadd.f32 %v40, %v42
    %v45 = vrsqrt.pop %v43
    %v46 = vrsqrt.pop %v44
    %v47 = vmul.f32 %v27, %v45
    %v48 = vmul.f32 %v28, %v46
    %49 = vst.msk [vmem:[#allocation6] sm:$0xff] %vm31, %v47
    %50 = vst.msk [vmem:[#allocation6 + $0x8] sm:$0xff] %vm31, %v48
    // Predicated region
    $region14: #{tpu_custom_call.1} parent=1 // pred_check
      _
    $region15: #{tpu_custom_call.1} parent=1 // pred_check_branch
      %52 = sbr.rel (0) target = $region17
    $region16: #{tpu_custom_call.1} parent=1 // pred_region
      %s54 = ssub.s32 256, 256
      %55 = vsyncadd [#allocation5], %s54
      %s56 = sshll.u32 [#allocation6], 4
      %s57 = int_to_ptr.vmem [resolvable:$true] %s56
      %62 = dma.vmem_to_hbm [thread:$0]  %s57, 256, %s2, [#allocation5], 128, 128, 8
    $region17: #{tpu_custom_call.1} parent=1 // pred_fallthru
      _
    // Predicated region
    $region18: #{tpu_custom_call.1} parent=1 // pred_check
      _
    $region19: #{tpu_custom_call.1} parent=1 // pred_check_branch
      %64 = sbr.rel (0) target = $region21
    $region20: #{tpu_custom_call.1} parent=1 // pred_region
      %65 = dma.done [#allocation5], 256
    $region21: #{tpu_custom_call.1} parent=1 // pred_fallthru
      _
    %66 = vsyncpa [#allocation4], 1
    %67 = vsyncpa [#allocation5], 1

</llo_original>
